<compile_context>
chip_gen: v5e
topology: v5e:2x2
jax: 0.10.0
libtpu: 0.0.40
codegen_flags: <defaults>
</compile_context>

<pallas_src>
import functools

import jax
import jax.numpy as jnp
from jax import lax
from jax.experimental import pallas as pl
from jax.experimental.pallas import tpu as pltpu


OUT_ROWS = 8  # transposed-output sublane rows (real logits in rows 0..1)


def _round_up(x: int, m: int) -> int:
    return ((x + m - 1) // m) * m


def _choose_tm(batch: int, tm_max: int) -> int:
    """Batch tile: either the full batch (single block) or a multiple of 128.

    For batch > 128 we force >= 2 grid steps so the "parallel" batch axis can
    be split across v7x's two TensorCores, while keeping tiles as large as
    possible (streaming roofline favours 512-1024 row tiles)."""
    if batch <= 128:
        return max(batch, 1)
    cap = max(128, (tm_max // 128) * 128)
    half = _round_up(-(-batch // 2), 128)   # ceil(batch/2) rounded up to 128
    return max(128, min(cap, half))


def discriminator_kernel(x_ref, w1_ref, b1_ref, w2_ref, b2_ref,
                         w3t_ref, b3t_ref, o_ref):
    # x_ref: (TM, input_dim) f32 -- cast to bf16 here (no extra wrapper pass).
    x = x_ref[...].astype(jnp.bfloat16)

    # Layer 1: bf16 MXU matmul, f32 accumulate; bias add / ReLU in f32.
    h1 = jnp.dot(x, w1_ref[...], preferred_element_type=jnp.float32) + b1_ref[...]
    h1 = jnp.maximum(h1, 0.0)

    # Layer 2.
    h2 = jnp.dot(h1.astype(jnp.bfloat16), w2_ref[...],
                 preferred_element_type=jnp.float32) + b2_ref[...]
    h2 = jnp.maximum(h2, 0.0)

    # Layer 3, emitted transposed: logits_t[c, m] = sum_k w3t[c, k] * h2[m, k]
    # so the MXU writes an (OUT_ROWS, TM) block with batch on the lane axis.
    logits_t = lax.dot_general(
        w3t_ref[...], h2.astype(jnp.bfloat16),
        dimension_numbers=(((1,), (1,)), ((), ())),
        preferred_element_type=jnp.float32) + b3t_ref[...]
    o_ref[...] = jax.nn.sigmoid(logits_t).astype(o_ref.dtype)


def prepare_params(params):
    """One-time weight preparation (bf16 cast + lane-dense zero padding).

    Call once and reuse the result across forward calls -- no per-call weight
    rebuilding happens inside the jitted forward."""
    w1, b1 = params["w1"], params["b1"]
    w2, b2 = params["w2"], params["b2"]
    w3, b3 = params["w3"], params["b3"]

    input_dim, hidden = w1.shape
    h4 = w2.shape[1]
    out_dim = w3.shape[1]
    hp = _round_up(max(hidden, 1), 128)
    h4p = _round_up(max(h4, 1), 128)

    w1p = jnp.zeros((input_dim, hp), jnp.float32).at[:, :hidden].set(w1)
    b1p = jnp.zeros((1, hp), jnp.float32).at[:, :hidden].set(b1.reshape(1, -1))
    w2p = jnp.zeros((hp, h4p), jnp.float32).at[:hidden, :h4].set(w2)
    b2p = jnp.zeros((1, h4p), jnp.float32).at[:, :h4].set(b2.reshape(1, -1))
    # Final layer stored transposed: (OUT_ROWS, h4p); real logits rows 0..out_dim-1.
    w3t = jnp.zeros((OUT_ROWS, h4p), jnp.float32).at[:out_dim, :h4].set(w3.T)
    b3t = jnp.zeros((OUT_ROWS, 1), jnp.float32).at[:out_dim, 0].set(b3.reshape(-1))

    return dict(
        w1=w1p.astype(jnp.bfloat16), b1=b1p,
        w2=w2p.astype(jnp.bfloat16), b2=b2p,
        w3t=w3t.astype(jnp.bfloat16), b3t=b3t,
    )


@functools.partial(
    jax.jit,
    static_argnames=("tm_max", "num_classes", "single_buffer_weights"))
def discriminator_forward(x, prep, *, tm_max: int = 1024, num_classes: int = 2,
                          single_buffer_weights: bool = True):
    """x: (B, input_dim) f32.  prep: output of prepare_params."""
    w1, b1 = prep["w1"], prep["b1"]
    w2, b2 = prep["w2"], prep["b2"]
    w3t, b3t = prep["w3t"], prep["b3t"]

    B, input_dim = x.shape
    hp = w1.shape[1]
    h4p = w2.shape[1]

    tm = _choose_tm(B, tm_max)
    grid = (pl.cdiv(B, tm),)

    # Resident weights/biases: full-array blocks, constant index map,
    # single-buffered so their VMEM footprint is not doubled by the pipeline.
    pm = pl.Buffered(1) if single_buffer_weights else None
    def const(shape):
        return pl.BlockSpec(shape, lambda i: (0, 0), pipeline_mode=pm)

    # --- VMEM budget (explicit, with headroom; capped at v7x's 64 MiB).
    bytes_w = (w1.size + w2.size + w3t.size) * 2          # bf16 weights
    bytes_b = (b1.size + b2.size + b3t.size) * 4          # f32 biases
    wbuf = 1 if single_buffer_weights else 2
    vmem_est = (
        wbuf * (bytes_w + bytes_b)
        + 2 * tm * input_dim * 4            # double-buffered x tiles (f32)
        + 2 * OUT_ROWS * tm * 4             # double-buffered out tiles (f32)
        + tm * (hp + h4p) * 4               # h1/h2 f32 intermediates
        + tm * (input_dim + hp + h4p) * 2   # bf16 casts fed to the MXU
    )
    vmem_limit = int(min(64 << 20, max(2 * vmem_est, 32 << 20)))

    flops = 2 * B * (input_dim * hp + hp * h4p + h4p * OUT_ROWS)
    bytes_accessed = B * input_dim * 4 + bytes_w + bytes_b + B * OUT_ROWS * 4

    out_t = pl.pallas_call(
        discriminator_kernel,
        out_shape=jax.ShapeDtypeStruct((OUT_ROWS, B), jnp.float32),
        grid=grid,
        in_specs=[
            pl.BlockSpec((tm, input_dim), lambda i: (i, 0)),   # x tile (f32)
            const((input_dim, hp)),                            # w1 (bf16)
            const((1, hp)),                                    # b1 (f32)
            const((hp, h4p)),                                  # w2 (bf16)
            const((1, h4p)),                                   # b2 (f32)
            const((OUT_ROWS, h4p)),                            # w3^T (bf16)
            const((OUT_ROWS, 1)),                              # b3^T (f32)
        ],
        out_specs=pl.BlockSpec((OUT_ROWS, tm), lambda i: (0, i)),
        compiler_params=pltpu.CompilerParams(
            dimension_semantics=("parallel",),
            vmem_limit_bytes=vmem_limit),
        cost_estimate=pl.CostEstimate(
            flops=flops,
            transcendentals=B * OUT_ROWS,
            bytes_accessed=bytes_accessed),
    )(x, w1, b1, w2, b2, w3t, b3t)

    # Real logits are rows 0..num_classes-1; ragged output columns beyond B
    # never exist (out_shape last dim is exactly B; partial stores are masked).
    return out_t[:num_classes].T


_single_buffer_ok = True


def run_forward(x, prep):
    """Forward with a safety fallback: if this JAX/Mosaic build rejects
    pl.Buffered(1) on the resident-weight specs, retry with default buffering."""
    global _single_buffer_ok
    if _single_buffer_ok:
        try:
            return discriminator_forward(x, prep, single_buffer_weights=True)
        except Exception:
            _single_buffer_ok = False
    return discriminator_forward(x, prep, single_buffer_weights=False)


def init_params(key, input_dim, hidden_dim):
    """Deterministic synthetic init (shapes match the nn.Linear layers,
    weights pre-transposed to (in_features, out_features))."""
    h4 = hidden_dim // 4
    ks = jax.random.split(key, 6)

    def lin(kw, kb, fan_in, fan_out):
        bound = 1.0 / (fan_in ** 0.5)
        w = jax.random.uniform(kw, (fan_in, fan_out), jnp.float32, -bound, bound)
        b = jax.random.uniform(kb, (1, fan_out), jnp.float32, -bound, bound)
        return w, b

    w1, b1 = lin(ks[0], ks[1], input_dim, hidden_dim)
    w2, b2 = lin(ks[2], ks[3], hidden_dim, h4)
    w3, b3 = lin(ks[4], ks[5], h4, 2)
    return dict(w1=w1, b1=b1, w2=w2, b2=b2, w3=w3, b3=b3)


def reference_forward(x, p):
    h1 = jnp.maximum(x @ p["w1"] + p["b1"], 0.0)
    h2 = jnp.maximum(h1 @ p["w2"] + p["b2"], 0.0)
    return jax.nn.sigmoid(h2 @ p["w3"] + p["b3"])


if __name__ == "__main__":
    key = jax.random.PRNGKey(0)
    k_x, k_x2, k_p = jax.random.split(key, 3)

    batch, input_dim, hidden_dim = 8, 16, 32   # hidden_dim // 4 == 8, out == 2
    params = init_params(k_p, input_dim, hidden_dim)
    prep = prepare_params(params)              # one-time weight prep

    # Small single-tile case.
    x = jax.random.normal(k_x, (batch, input_dim), jnp.float32)
    out = jax.block_until_ready(run_forward(x, prep))
    ref = reference_forward(x, params)
    assert out.shape == (batch, 2)
    # bf16 matmul operands -> loose tolerance vs. the f32 reference.
    assert jnp.allclose(out, ref, atol=2e-2, rtol=2e-2), float(
        jnp.max(jnp.abs(out - ref)))

    # Multi-step "parallel" grid with a ragged last tile: exercises the
    # masked partial-block path and the v7x two-TensorCore split.
    batch2 = 160
    x2 = jax.random.normal(k_x2, (batch2, input_dim), jnp.float32)
    out2 = jax.block_until_ready(run_forward(x2, prep))
    ref2 = reference_forward(x2, params)
    assert out2.shape == (batch2, 2)
    assert jnp.allclose(out2, ref2, atol=2e-2, rtol=2e-2), float(
        jnp.max(jnp.abs(out2 - ref2)))

    print("KERNEL_OK")
</pallas_src>

<mosaic_0001>
module attributes {stable_mosaic.version = 11 : i64} {
  func.func @discriminator_kernel(%arg0: i32, %arg1: memref<8x16xf32, #tpu.memory_space<vmem>>, %arg2: memref<16x128xbf16, #tpu.memory_space<vmem>>, %arg3: memref<1x128xf32, #tpu.memory_space<vmem>>, %arg4: memref<128x128xbf16, #tpu.memory_space<vmem>>, %arg5: memref<1x128xf32, #tpu.memory_space<vmem>>, %arg6: memref<8x128xbf16, #tpu.memory_space<vmem>>, %arg7: memref<8x1xf32, #tpu.memory_space<vmem>>, %arg8: memref<8x8xf32, #tpu.memory_space<vmem>>) attributes {dimension_semantics = [#tpu.dimension_semantics<parallel>], iteration_bounds = array<i64: 1>, scalar_prefetch = 0 : i64, scratch_operands = 0 : i64, tpu.core_type = #tpu.core_type<tc>, window_params = [{transform_indices = @transform_0, window_bounds = array<i64: 8, 16>}, {pipeline_mode = #tpu.pipeline_mode<synchronous>, transform_indices = @transform_1, window_bounds = array<i64: 16, 128>}, {pipeline_mode = #tpu.pipeline_mode<synchronous>, transform_indices = @transform_2, window_bounds = array<i64: 1, 128>}, {pipeline_mode = #tpu.pipeline_mode<synchronous>, transform_indices = @transform_3, window_bounds = array<i64: 128, 128>}, {pipeline_mode = #tpu.pipeline_mode<synchronous>, transform_indices = @transform_4, window_bounds = array<i64: 1, 128>}, {pipeline_mode = #tpu.pipeline_mode<synchronous>, transform_indices = @transform_5, window_bounds = array<i64: 8, 128>}, {pipeline_mode = #tpu.pipeline_mode<synchronous>, transform_indices = @transform_6, window_bounds = array<i64: 8, 1>}, {transform_indices = @transform_7, window_bounds = array<i64: 8, 8>}]} {
    %c0 = arith.constant 0 : index
    %c0_0 = arith.constant 0 : index
    %0 = vector.load %arg1[%c0, %c0_0] : memref<8x16xf32, #tpu.memory_space<vmem>>, vector<8x16xf32>
    %1 = arith.truncf %0 : vector<8x16xf32> to vector<8x16xbf16>
    %c0_1 = arith.constant 0 : index
    %c0_2 = arith.constant 0 : index
    %2 = vector.load %arg2[%c0_1, %c0_2] : memref<16x128xbf16, #tpu.memory_space<vmem>>, vector<16x128xbf16>
    %cst = arith.constant dense<0.000000e+00> : vector<8x128xf32>
    %3 = tpu.matmul %1, %2, %cst {dimension_numbers = #tpu.dot_dimension_numbers<[1], [0], [0], [1], [0, 0, 1, 1], [], []>} : vector<8x16xbf16>, vector<16x128xbf16>, vector<8x128xf32> -> vector<8x128xf32>
    %c0_3 = arith.constant 0 : index
    %c0_4 = arith.constant 0 : index
    %4 = vector.load %arg3[%c0_3, %c0_4] : memref<1x128xf32, #tpu.memory_space<vmem>>, vector<1x128xf32>
    %5 = vector.broadcast %4 : vector<1x128xf32> to vector<8x128xf32>
    %6 = arith.addf %3, %5 : vector<8x128xf32>
    %cst_5 = arith.constant 0.000000e+00 : f32
    %7 = vector.broadcast %cst_5 : f32 to vector<8x128xf32>
    %8 = arith.maximumf %6, %7 : vector<8x128xf32>
    %9 = arith.truncf %8 : vector<8x128xf32> to vector<8x128xbf16>
    %c0_6 = arith.constant 0 : index
    %c0_7 = arith.constant 0 : index
    %10 = vector.load %arg4[%c0_6, %c0_7] : memref<128x128xbf16, #tpu.memory_space<vmem>>, vector<128x128xbf16>
    %cst_8 = arith.constant dense<0.000000e+00> : vector<8x128xf32>
    %11 = tpu.matmul %9, %10, %cst_8 {dimension_numbers = #tpu.dot_dimension_numbers<[1], [0], [0], [1], [0, 0, 1, 1], [], []>} : vector<8x128xbf16>, vector<128x128xbf16>, vector<8x128xf32> -> vector<8x128xf32>
    %c0_9 = arith.constant 0 : index
    %c0_10 = arith.constant 0 : index
    %12 = vector.load %arg5[%c0_9, %c0_10] : memref<1x128xf32, #tpu.memory_space<vmem>>, vector<1x128xf32>
    %13 = vector.broadcast %12 : vector<1x128xf32> to vector<8x128xf32>
    %14 = arith.addf %11, %13 : vector<8x128xf32>
    %cst_11 = arith.constant 0.000000e+00 : f32
    %15 = vector.broadcast %cst_11 : f32 to vector<8x128xf32>
    %16 = arith.maximumf %14, %15 : vector<8x128xf32>
    %c0_12 = arith.constant 0 : index
    %c0_13 = arith.constant 0 : index
    %17 = vector.load %arg6[%c0_12, %c0_13] : memref<8x128xbf16, #tpu.memory_space<vmem>>, vector<8x128xbf16>
    %18 = arith.truncf %16 : vector<8x128xf32> to vector<8x128xbf16>
    %cst_14 = arith.constant dense<0.000000e+00> : vector<8x8xf32>
    %19 = tpu.matmul %17, %18, %cst_14 {dimension_numbers = #tpu.dot_dimension_numbers<[1], [1], [0], [0], [0, 0, 1, 0], [], []>} : vector<8x128xbf16>, vector<8x128xbf16>, vector<8x8xf32> -> vector<8x8xf32>
    %c0_15 = arith.constant 0 : index
    %c0_16 = arith.constant 0 : index
    %20 = vector.load %arg7[%c0_15, %c0_16] : memref<8x1xf32, #tpu.memory_space<vmem>>, vector<8x1xf32>
    %21 = vector.broadcast %20 : vector<8x1xf32> to vector<8x8xf32>
    %22 = arith.addf %19, %21 : vector<8x8xf32>
    %23 = arith.negf %22 : vector<8x8xf32>
    %24 = math.exp %23 : vector<8x8xf32>
    %cst_17 = arith.constant 1.000000e+00 : f32
    %25 = vector.broadcast %cst_17 : f32 to vector<8x8xf32>
    %26 = arith.addf %25, %24 : vector<8x8xf32>
    %27 = arith.divf %25, %26 : vector<8x8xf32>
    %c0_18 = arith.constant 0 : index
    %c0_19 = arith.constant 0 : index
    %28 = vector.load %arg8[%c0_18, %c0_19] : memref<8x8xf32, #tpu.memory_space<vmem>>, vector<8x8xf32>
    tpu.vector_store %arg8[%c0_18, %c0_19], %27 {strides = array<i32>} : memref<8x8xf32, #tpu.memory_space<vmem>>, vector<8x8xf32>,
    return
  }
  func.func @transform_0(%arg0: i32) -> (i32, i32) {
    %c0_i32 = arith.constant 0 : i32
    %c0_i32_0 = arith.constant 0 : i32
    return %arg0, %c0_i32 : i32, i32
  }
  func.func @transform_1(%arg0: i32) -> (i32, i32) {
    %c0_i32 = arith.constant 0 : i32
    %c0_i32_0 = arith.constant 0 : i32
    %c0_i32_1 = arith.constant 0 : i32
    return %c0_i32, %c0_i32_0 : i32, i32
  }
  func.func @transform_2(%arg0: i32) -> (i32, i32) {
    %c0_i32 = arith.constant 0 : i32
    %c0_i32_0 = arith.constant 0 : i32
    %c0_i32_1 = arith.constant 0 : i32
    return %c0_i32, %c0_i32_0 : i32, i32
  }
  func.func @transform_3(%arg0: i32) -> (i32, i32) {
    %c0_i32 = arith.constant 0 : i32
    %c0_i32_0 = arith.constant 0 : i32
    %c0_i32_1 = arith.constant 0 : i32
    return %c0_i32, %c0_i32_0 : i32, i32
  }
  func.func @transform_4(%arg0: i32) -> (i32, i32) {
    %c0_i32 = arith.constant 0 : i32
    %c0_i32_0 = arith.constant 0 : i32
    %c0_i32_1 = arith.constant 0 : i32
    return %c0_i32, %c0_i32_0 : i32, i32
  }
  func.func @transform_5(%arg0: i32) -> (i32, i32) {
    %c0_i32 = arith.constant 0 : i32
    %c0_i32_0 = arith.constant 0 : i32
    %c0_i32_1 = arith.constant 0 : i32
    return %c0_i32, %c0_i32_0 : i32, i32
  }
  func.func @transform_6(%arg0: i32) -> (i32, i32) {
    %c0_i32 = arith.constant 0 : i32
    %c0_i32_0 = arith.constant 0 : i32
    %c0_i32_1 = arith.constant 0 : i32
    return %c0_i32, %c0_i32_0 : i32, i32
  }
  func.func @transform_7(%arg0: i32) -> (i32, i32) {
    %c0_i32 = arith.constant 0 : i32
    %c0_i32_0 = arith.constant 0 : i32
    return %c0_i32, %arg0 : i32, i32
  }
}

module attributes {stable_mosaic.version = 11 : i64} {
  func.func @discriminator_kernel(%arg0: i32, %arg1: memref<8x16xf32, #tpu.memory_space<vmem>>, %arg2: memref<16x128xbf16, #tpu.memory_space<vmem>>, %arg3: memref<1x128xf32, #tpu.memory_space<vmem>>, %arg4: memref<128x128xbf16, #tpu.memory_space<vmem>>, %arg5: memref<1x128xf32, #tpu.memory_space<vmem>>, %arg6: memref<8x128xbf16, #tpu.memory_space<vmem>>, %arg7: memref<8x1xf32, #tpu.memory_space<vmem>>, %arg8: memref<8x8xf32, #tpu.memory_space<vmem>>) attributes {dimension_semantics = [#tpu.dimension_semantics<parallel>], iteration_bounds = array<i64: 1>, scalar_prefetch = 0 : i64, scratch_operands = 0 : i64, tpu.core_type = #tpu.core_type<tc>, window_params = [{transform_indices = @transform_0, window_bounds = array<i64: 8, 16>}, {pipeline_mode = #tpu.pipeline_mode<synchronous>, transform_indices = @transform_1, window_bounds = array<i64: 16, 128>}, {pipeline_mode = #tpu.pipeline_mode<synchronous>, transform_indices = @transform_2, window_bounds = array<i64: 1, 128>}, {pipeline_mode = #tpu.pipeline_mode<synchronous>, transform_indices = @transform_3, window_bounds = array<i64: 128, 128>}, {pipeline_mode = #tpu.pipeline_mode<synchronous>, transform_indices = @transform_4, window_bounds = array<i64: 1, 128>}, {pipeline_mode = #tpu.pipeline_mode<synchronous>, transform_indices = @transform_5, window_bounds = array<i64: 8, 128>}, {pipeline_mode = #tpu.pipeline_mode<synchronous>, transform_indices = @transform_6, window_bounds = array<i64: 8, 1>}, {transform_indices = @transform_7, window_bounds = array<i64: 8, 8>}]} {
    %c0 = arith.constant 0 : index
    %c0_0 = arith.constant 0 : index
    %0 = vector.load %arg1[%c0, %c0_0] : memref<8x16xf32, #tpu.memory_space<vmem>>, vector<8x16xf32>
    %1 = arith.truncf %0 : vector<8x16xf32> to vector<8x16xbf16>
    %c0_1 = arith.constant 0 : index
    %c0_2 = arith.constant 0 : index
    %2 = vector.load %arg2[%c0_1, %c0_2] : memref<16x128xbf16, #tpu.memory_space<vmem>>, vector<16x128xbf16>
    %cst = arith.constant dense<0.000000e+00> : vector<8x128xf32>
    %3 = tpu.matmul %1, %2, %cst {dimension_numbers = #tpu.dot_dimension_numbers<[1], [0], [0], [1], [0, 0, 1, 1], [], []>} : vector<8x16xbf16>, vector<16x128xbf16>, vector<8x128xf32> -> vector<8x128xf32>
    %c0_3 = arith.constant 0 : index
    %c0_4 = arith.constant 0 : index
    %4 = vector.load %arg3[%c0_3, %c0_4] : memref<1x128xf32, #tpu.memory_space<vmem>>, vector<1x128xf32>
    %5 = vector.broadcast %4 : vector<1x128xf32> to vector<8x128xf32>
    %6 = arith.addf %3, %5 : vector<8x128xf32>
    %cst_5 = arith.constant 0.000000e+00 : f32
    %7 = vector.broadcast %cst_5 : f32 to vector<8x128xf32>
    %8 = arith.maximumf %6, %7 : vector<8x128xf32>
    %9 = arith.truncf %8 : vector<8x128xf32> to vector<8x128xbf16>
    %c0_6 = arith.constant 0 : index
    %c0_7 = arith.constant 0 : index
    %10 = vector.load %arg4[%c0_6, %c0_7] : memref<128x128xbf16, #tpu.memory_space<vmem>>, vector<128x128xbf16>
    %cst_8 = arith.constant dense<0.000000e+00> : vector<8x128xf32>
    %11 = tpu.matmul %9, %10, %cst_8 {dimension_numbers = #tpu.dot_dimension_numbers<[1], [0], [0], [1], [0, 0, 1, 1], [], []>} : vector<8x128xbf16>, vector<128x128xbf16>, vector<8x128xf32> -> vector<8x128xf32>
    %c0_9 = arith.constant 0 : index
    %c0_10 = arith.constant 0 : index
    %12 = vector.load %arg5[%c0_9, %c0_10] : memref<1x128xf32, #tpu.memory_space<vmem>>, vector<1x128xf32>
    %13 = vector.broadcast %12 : vector<1x128xf32> to vector<8x128xf32>
    %14 = arith.addf %11, %13 : vector<8x128xf32>
    %cst_11 = arith.constant 0.000000e+00 : f32
    %15 = vector.broadcast %cst_11 : f32 to vector<8x128xf32>
    %16 = arith.maximumf %14, %15 : vector<8x128xf32>
    %c0_12 = arith.constant 0 : index
    %c0_13 = arith.constant 0 : index
    %17 = vector.load %arg6[%c0_12, %c0_13] : memref<8x128xbf16, #tpu.memory_space<vmem>>, vector<8x128xbf16>
    %18 = arith.truncf %16 : vector<8x128xf32> to vector<8x128xbf16>
    %cst_14 = arith.constant dense<0.000000e+00> : vector<8x8xf32>
    %19 = tpu.matmul %17, %18, %cst_14 {dimension_numbers = #tpu.dot_dimension_numbers<[1], [1], [0], [0], [0, 0, 1, 0], [], []>} : vector<8x128xbf16>, vector<8x128xbf16>, vector<8x8xf32> -> vector<8x8xf32>
    %c0_15 = arith.constant 0 : index
    %c0_16 = arith.constant 0 : index
    %20 = vector.load %arg7[%c0_15, %c0_16] : memref<8x1xf32, #tpu.memory_space<vmem>>, vector<8x1xf32>
    %21 = vector.broadcast %20 : vector<8x1xf32> to vector<8x8xf32>
    %22 = arith.addf %19, %21 : vector<8x8xf32>
    %23 = arith.negf %22 : vector<8x8xf32>
    %24 = math.exp %23 : vector<8x8xf32>
    %cst_17 = arith.constant 1.000000e+00 : f32
    %25 = vector.broadcast %cst_17 : f32 to vector<8x8xf32>
    %26 = arith.addf %25, %24 : vector<8x8xf32>
    %27 = arith.divf %25, %26 : vector<8x8xf32>
    %c0_18 = arith.constant 0 : index
    %c0_19 = arith.constant 0 : index
    %28 = vector.load %arg8[%c0_18, %c0_19] : memref<8x8xf32, #tpu.memory_space<vmem>>, vector<8x8xf32>
    tpu.vector_store %arg8[%c0_18, %c0_19], %27 {strides = array<i32>} : memref<8x8xf32, #tpu.memory_space<vmem>>, vector<8x8xf32>,
    return
  }
  func.func @transform_0(%arg0: i32) -> (i32, i32) {
    %c0_i32 = arith.constant 0 : i32
    %c0_i32_0 = arith.constant 0 : i32
    return %arg0, %c0_i32 : i32, i32
  }
  func.func @transform_1(%arg0: i32) -> (i32, i32) {
    %c0_i32 = arith.constant 0 : i32
    %c0_i32_0 = arith.constant 0 : i32
    %c0_i32_1 = arith.constant 0 : i32
    return %c0_i32, %c0_i32_0 : i32, i32
  }
  func.func @transform_2(%arg0: i32) -> (i32, i32) {
    %c0_i32 = arith.constant 0 : i32
    %c0_i32_0 = arith.constant 0 : i32
    %c0_i32_1 = arith.constant 0 : i32
    return %c0_i32, %c0_i32_0 : i32, i32
  }
  func.func @transform_3(%arg0: i32) -> (i32, i32) {
    %c0_i32 = arith.constant 0 : i32
    %c0_i32_0 = arith.constant 0 : i32
    %c0_i32_1 = arith.constant 0 : i32
    return %c0_i32, %c0_i32_0 : i32, i32
  }
  func.func @transform_4(%arg0: i32) -> (i32, i32) {
    %c0_i32 = arith.constant 0 : i32
    %c0_i32_0 = arith.constant 0 : i32
    %c0_i32_1 = arith.constant 0 : i32
    return %c0_i32, %c0_i32_0 : i32, i32
  }
  func.func @transform_5(%arg0: i32) -> (i32, i32) {
    %c0_i32 = arith.constant 0 : i32
    %c0_i32_0 = arith.constant 0 : i32
    %c0_i32_1 = arith.constant 0 : i32
    return %c0_i32, %c0_i32_0 : i32, i32
  }
  func.func @transform_6(%arg0: i32) -> (i32, i32) {
    %c0_i32 = arith.constant 0 : i32
    %c0_i32_0 = arith.constant 0 : i32
    %c0_i32_1 = arith.constant 0 : i32
    return %c0_i32, %c0_i32_0 : i32, i32
  }
  func.func @transform_7(%arg0: i32) -> (i32, i32) {
    %c0_i32 = arith.constant 0 : i32
    %c0_i32_0 = arith.constant 0 : i32
    return %c0_i32, %arg0 : i32, i32
  }
}

</mosaic_0001>

<llo_original>
// kernel: discriminator_forward.1
$region0: #{discriminator_forward.1}
  #allocation0 [shape = 'u32[]', space=smem, size = 0x4, offset = 0x4, fixed_abs, tag = 'smem constant byte address 0x4 - core index']
  #allocation1 [shape = 'u32[72,128]{1,0:T(1,128)}', space=vmem, size = 0x9000, scoped, tag = 'internal scratch']
  %s0 = inlined_call_operand.vmem [shape: f32[8,16], index: 0, kind: input, shape index: {}]
  %s1 = inlined_call_operand.hbm [shape: bf16[16,128], index: 1, kind: input, shape index: {}]
  %s2 = inlined_call_operand.hbm [shape: f32[1,128], index: 2, kind: input, shape index: {}]
  %s3 = inlined_call_operand.hbm [shape: bf16[128,128], index: 3, kind: input, shape index: {}]
  %s4 = inlined_call_operand.hbm [shape: f32[1,128], index: 4, kind: input, shape index: {}]
  %s5 = inlined_call_operand.vmem [shape: bf16[8,128], index: 5, kind: input, shape index: {}]
  %s6 = inlined_call_operand.vmem [shape: f32[8,1], index: 6, kind: input, shape index: {}]
  %s7 = inlined_call_operand.vmem [shape: f32[8,8], index: 7, kind: output, shape index: {}]
  %s8 = sld [smem:[#allocation0]]
  $region54: #{discriminator_forward.1} parent=0
    _
  %s10 = ssub.s32 1, %s8
  %s11 = scalar_select 0, %s10, %s8
  $region1: #{discriminator_forward.1} parent=0
    #allocation2 [shape = 'u8[4096]{0}', space=vmem, size = 0x1000, scoped, tag = 'input window, operand 1, single buffered']
    #allocation3 [shape = 's32[1]{0}', space=sflag, size = 0x4, scoped, tag = 'scoped memory for discriminator_forward.1']
    #allocation4 [shape = 'u8[512]{0}', space=vmem, size = 0x400, scoped, tag = 'input window, operand 2, single buffered']
    #allocation5 [shape = 's32[1]{0}', space=sflag, size = 0x4, scoped, tag = 'scoped memory for discriminator_forward.1']
    #allocation6 [shape = 'u8[32768]{0}', space=vmem, size = 0x8000, scoped, tag = 'input window, operand 3, single buffered']
    #allocation7 [shape = 'u8[512]{0}', space=vmem, size = 0x400, scoped, tag = 'input window, operand 4, single buffered']
    #allocation8 [shape = 's32[1]{0}', space=sflag, size = 0x4, scoped, tag = 'scoped memory for discriminator_forward.1']
    %12 = vsyncpa [#allocation3], 0
    %13 = vsyncpa [#allocation5], 0
    %14 = vsyncpa [#allocation8], 0
    // Predicated region
    $region2: #{discriminator_forward.1} parent=1 // pred_check
      _
    $region3: #{discriminator_forward.1} parent=1 // pred_check_branch
      %16 = sbr.rel (0) target = $region5
    $region4: #{discriminator_forward.1} parent=1 // pred_region
      _
    $region5: #{discriminator_forward.1} parent=1 // pred_fallthru
      _
    // Predicated region
    $region6: #{discriminator_forward.1} parent=1 // pred_check
      _
    $region7: #{discriminator_forward.1} parent=1 // pred_check_branch
      %18 = sbr.rel (0) target = $region9
    $region8: #{discriminator_forward.1} parent=1 // pred_region
      %20 = vsyncadd [#allocation3], 0
      %s21 = sshll.u32 %s1, 4
      %s22 = int_to_ptr.hbm [resolvable:$true] %s21
      %s23 = sshll.u32 [#allocation2], 4
      %s24 = int_to_ptr.vmem [resolvable:$true] %s23
      %29 = dma.hbm_to_vmem [thread:$0]  %s22, 128, %s24, [#allocation3], 64, 64, 4
    $region9: #{discriminator_forward.1} parent=1 // pred_fallthru
      _
    // Predicated region
    $region10: #{discriminator_forward.1} parent=1 // pred_check
      _
    $region11: #{discriminator_forward.1} parent=1 // pred_check_branch
      %31 = sbr.rel (0) target = $region13
    $region12: #{discriminator_forward.1} parent=1 // pred_region
      %33 = vsyncadd [#allocation5], 0
      %s35 = sshll.u32 %s2, 4
      %s36 = int_to_ptr.hbm [resolvable:$true] %s35
      %s37 = sshll.u32 [#allocation4], 4
      %s38 = int_to_ptr.vmem [resolvable:$true] %s37
      %40 = dma.hbm_to_vmem [thread:$0]  %s36, 16, %s38, [#allocation5]
    $region13: #{discriminator_forward.1} parent=1 // pred_fallthru
      _
    // Predicated region
    $region14: #{discriminator_forward.1} parent=1 // pred_check
      _
    $region15: #{discriminator_forward.1} parent=1 // pred_check_branch
      %42 = sbr.rel (0) target = $region17
    $region16: #{discriminator_forward.1} parent=1 // pred_region
      %44 = vsyncadd [#allocation5], 0
      %s45 = sshll.u32 %s3, 4
      %s46 = int_to_ptr.hbm [resolvable:$true] %s45
      %s47 = sshll.u32 [#allocation6], 4
      %s48 = int_to_ptr.vmem [resolvable:$true] %s47
      %53 = dma.hbm_to_vmem [thread:$0]  %s46, 1024, %s48, [#allocation5], 64, 64, 4
    $region17: #{discriminator_forward.1} parent=1 // pred_fallthru
      _
    // Predicated region
    $region18: #{discriminator_forward.1} parent=1 // pred_check
      _
    $region19: #{discriminator_forward.1} parent=1 // pred_check_branch
      %55 = sbr.rel (0) target = $region21
    $region20: #{discriminator_forward.1} parent=1 // pred_region
      %57 = vsyncadd [#allocation8], 0
      %s59 = sshll.u32 %s4, 4
      %s60 = int_to_ptr.hbm [resolvable:$true] %s59
      %s61 = sshll.u32 [#allocation7], 4
      %s62 = int_to_ptr.vmem [resolvable:$true] %s61
      %64 = dma.hbm_to_vmem [thread:$0]  %s60, 16, %s62, [#allocation8]
    $region21: #{discriminator_forward.1} parent=1 // pred_fallthru
      _
    // Predicated region
    $region22: #{discriminator_forward.1} parent=1 // pred_check
      _
    $region23: #{discriminator_forward.1} parent=1 // pred_check_branch
      %66 = sbr.rel (0) target = $region25
    $region24: #{discriminator_forward.1} parent=1 // pred_region
      _
    $region25: #{discriminator_forward.1} parent=1 // pred_fallthru
      _
    // Predicated region
    $region26: #{discriminator_forward.1} parent=1 // pred_check
      _
    $region27: #{discriminator_forward.1} parent=1 // pred_check_branch
      %68 = sbr.rel (0) target = $region29
    $region28: #{discriminator_forward.1} parent=1 // pred_region
      _
    $region29: #{discriminator_forward.1} parent=1 // pred_fallthru
      _
    // Predicated region
    $region30: #{discriminator_forward.1} parent=1 // pred_check
      _
    $region31: #{discriminator_forward.1} parent=1 // pred_check_branch
      %70 = sbr.rel (0) target = $region33
    $region32: #{discriminator_forward.1} parent=1 // pred_region
      %72 = dma.done [#allocation3], 128
    $region33: #{discriminator_forward.1} parent=1 // pred_fallthru
      _
    // Predicated region
    $region34: #{discriminator_forward.1} parent=1 // pred_check
      _
    $region35: #{discriminator_forward.1} parent=1 // pred_check_branch
      %74 = sbr.rel (0) target = $region37
    $region36: #{discriminator_forward.1} parent=1 // pred_region
      %76 = dma.done [#allocation5], 16
    $region37: #{discriminator_forward.1} parent=1 // pred_fallthru
      _
    // Predicated region
    $region38: #{discriminator_forward.1} parent=1 // pred_check
      _
    $region39: #{discriminator_forward.1} parent=1 // pred_check_branch
      %78 = sbr.rel (0) target = $region41
    $region40: #{discriminator_forward.1} parent=1 // pred_region
      %80 = dma.done [#allocation5], 1024
    $region41: #{discriminator_forward.1} parent=1 // pred_fallthru
      _
    // Predicated region
    $region42: #{discriminator_forward.1} parent=1 // pred_check
      _
    $region43: #{discriminator_forward.1} parent=1 // pred_check_branch
      %82 = sbr.rel (0) target = $region45
    $region44: #{discriminator_forward.1} parent=1 // pred_region
      %84 = dma.done [#allocation8], 16
    $region45: #{discriminator_forward.1} parent=1 // pred_fallthru
      _
    %v86 = vld [vmem:[%s0] sm:$0xff]
    %v87 = vpack.c.bf16 %v86, %v86
    %v88 = vld [vmem:[#allocation2] sm:$0xf]
    %v89 = vld [vmem:[#allocation2 + $0x4] sm:$0xf]
    %v90 = vld [vmem:[#allocation4] sm:$0x1]
    %v92 = vperm.slane %v90, 0
    %v96 = vunpack.c.l.b16 %v88
    %v97 = vunpack.c.l.b16 %v89
    %v98 = vpack.c.b16 %v97, %v96
    %vm100 = vcmask 130048
    %v102 = vsel %vm100, %v87, 0
    %104 = vmatpush.bf16.msra.mxu0 0
    %105 = vmatpush.bf16.msra.mxu0 0
    %106 = vmatpush.bf16.msra.mxu0 0
    %107 = vmatpush.bf16.msra.mxu0 0
    %108 = vmatpush.bf16.msra.mxu0 0
    %109 = vmatpush.bf16.msra.mxu0 0
    %110 = vmatpush.bf16.msra.mxu0 0
    %111 = vmatpush.bf16.msra.mxu0 %v98
    %112 = vmatmul.bf16.gmra.mxu0 %v102
    %v113 = vpop.f32.mrf.mxu0
    %v114 = vadd.f32 %v92, %v113
    %v115 = vpop.f32.mrf.mxu0
    %116 = vdwg.mxu0
    %v117 = vmax.f32 %v114, 0.0
    %v118 = vpack.c.bf16 %v117, %v117
    %v119 = vld [vmem:[#allocation6] sm:$0xf]
    %v120 = vld [vmem:[#allocation6 + $0x4] sm:$0xf]
    %v121 = vld [vmem:[#allocation6 + $0x8] sm:$0xf]
    %v122 = vld [vmem:[#allocation6 + $0xc] sm:$0xf]
    %v123 = vld [vmem:[#allocation6 + $0x10] sm:$0xf]
    %v124 = vld [vmem:[#allocation6 + $0x14] sm:$0xf]
    %v125 = vld [vmem:[#allocation6 + $0x18] sm:$0xf]
    %v126 = vld [vmem:[#allocation6 + $0x1c] sm:$0xf]
    %v127 = vld [vmem:[#allocation6 + $0x20] sm:$0xf]
    %v128 = vld [vmem:[#allocation6 + $0x24] sm:$0xf]
    %v129 = vld [vmem:[#allocation6 + $0x28] sm:$0xf]
    %v130 = vld [vmem:[#allocation6 + $0x2c] sm:$0xf]
    %v131 = vld [vmem:[#allocation6 + $0x30] sm:$0xf]
    %v132 = vld [vmem:[#allocation6 + $0x34] sm:$0xf]
    %v133 = vld [vmem:[#allocation6 + $0x38] sm:$0xf]
    %v134 = vld [vmem:[#allocation6 + $0x3c] sm:$0xf]
    %v135 = vld [vmem:[#allocation7] sm:$0x1]
    %v137 = vperm.slane %v135, 0
    %v155 = vunpack.c.l.b16 %v119
    %v156 = vunpack.c.l.b16 %v120
    %v157 = vunpack.c.l.b16 %v121
    %v158 = vunpack.c.l.b16 %v122
    %v159 = vunpack.c.l.b16 %v123
    %v160 = vunpack.c.l.b16 %v124
    %v161 = vunpack.c.l.b16 %v125
    %v162 = vunpack.c.l.b16 %v126
    %v163 = vunpack.c.l.b16 %v127
    %v164 = vunpack.c.l.b16 %v128
    %v165 = vunpack.c.l.b16 %v129
    %v166 = vunpack.c.l.b16 %v130
    %v167 = vunpack.c.l.b16 %v131
    %v168 = vunpack.c.l.b16 %v132
    %v169 = vunpack.c.l.b16 %v133
    %v170 = vunpack.c.l.b16 %v134
    %v171 = vpack.c.b16 %v156, %v155
    %v172 = vpack.c.b16 %v158, %v157
    %v173 = vpack.c.b16 %v160, %v159
    %v174 = vpack.c.b16 %v162, %v161
    %v175 = vpack.c.b16 %v164, %v163
    %v176 = vpack.c.b16 %v166, %v165
    %v177 = vpack.c.b16 %v168, %v167
    %v178 = vpack.c.b16 %v170, %v169
    %187 = vmatpush.bf16.msra.mxu0 %v178
    %188 = vmatpush.bf16.msra.mxu0 %v177
    %189 = vmatpush.bf16.msra.mxu0 %v176
    %190 = vmatpush.bf16.msra.mxu0 %v175
    %191 = vmatpush.bf16.msra.mxu0 %v174
    %192 = vmatpush.bf16.msra.mxu0 %v173
    %193 = vmatpush.bf16.msra.mxu0 %v172
    %194 = vmatpush.bf16.msra.mxu0 %v171
    %195 = vmatmul.bf16.gmra.mxu0 %v118
    %v196 = vpop.f32.mrf.mxu0
    %v197 = vadd.f32 %v137, %v196
    %v198 = vpop.f32.mrf.mxu0
    %199 = vdwg.mxu0
    %v200 = vmax.f32 %v197, 0.0
    %v201 = vld [vmem:[%s5] sm:$0xf]
    %v202 = vpack.c.bf16 %v200, %v200
    %v203 = vld [vmem:[%s6] sm:$0xff]
    %205 = vset.pattern.permute.xlu0 0
    %206 = vperm.xlu0 %205, %v203
    %v207 = vpop.permute.xlu0 %206
    %209 = vmatpush.bf16.xpose.msra.mxu0 0
    %210 = vmatpush.bf16.xpose.msra.mxu0 0
    %211 = vmatpush.bf16.xpose.msra.mxu0 0
    %212 = vmatpush.bf16.xpose.msra.mxu0 0
    %213 = vmatpush.bf16.xpose.msra.mxu0 0
    %214 = vmatpush.bf16.xpose.msra.mxu0 0
    %215 = vmatpush.bf16.xpose.msra.mxu0 0
    %216 = vmatpush.bf16.xpose.msra.mxu0 %v202
    %217 = vmatmul.bf16.gmra.mxu0 %v201
    %v218 = vpop.f32.mrf.mxu0
    %v219 = vadd.f32 %v207, %v218
    %v220 = vpop.f32.mrf.mxu0
    %221 = vdwg.mxu0
    %v222 = vxor.u32 %v219, 2147483648
    %v223 = vmul.f32 %v222, 1.442695
    %v224 = vpow.pop %v223
    %v225 = vadd.f32 %v224, 1.0
    %v226 = vrcp.pop %v225
    %v227 = vmul.f32 %v225, %v226
    %v228 = vsub.f32 1.0, %v227
    %v229 = vmul.f32 %v226, %v228
    %v230 = vadd.f32 %v226, %v229
    %vm231 = vweird.f32 %v225
    %vm232 = vweird.f32 %v226
    %vm233 = vmor %vm231, %vm232
    %v234 = vsel %vm233, %v226, %v230
    %v235 = vand.u32 2147483647, %v225
    %vm236 = vcmp.eq.f32.partialorder %v235, 8.507059e+37
    %v237 = vand.u32 %v225, 2147483648
    %v238 = vor.u32 1.1754944e-38, %v237
    %v239 = vsel %vm236, %v238, %v234
    %v240 = vmul.f32 1.0, %v239
    %vm241 = vcmask 64512
    %242 = vst.msk [vmem:[%s7] sm:$0xff] %vm241, %v240
    // Predicated region
    $region46: #{discriminator_forward.1} parent=1 // pred_check
      _
    $region47: #{discriminator_forward.1} parent=1 // pred_check_branch
      %244 = sbr.rel (0) target = $region49
    $region48: #{discriminator_forward.1} parent=1 // pred_region
      _
    $region49: #{discriminator_forward.1} parent=1 // pred_fallthru
      _
    // Predicated region
    $region50: #{discriminator_forward.1} parent=1 // pred_check
      _
    $region51: #{discriminator_forward.1} parent=1 // pred_check_branch
      %246 = sbr.rel (0) target = $region53
    $region52: #{discriminator_forward.1} parent=1 // pred_region
      _
    $region53: #{discriminator_forward.1} parent=1 // pred_fallthru
      _
    %247 = vsyncpa [#allocation3], 1
    %248 = vsyncpa [#allocation5], 1
    %249 = vsyncpa [#allocation8], 1

// kernel: discriminator_forward.1
$region0: #{discriminator_forward.1}
  #allocation0 [shape = 'u32[]', space=smem, size = 0x4, offset = 0x4, fixed_abs, tag = 'smem constant byte address 0x4 - core index']
  #allocation1 [shape = 'u32[72,128]{1,0:T(1,128)}', space=vmem, size = 0x9000, scoped, tag = 'internal scratch']
  %s0 = inlined_call_operand.vmem [shape: f32[8,16], index: 0, kind: input, shape index: {}]
  %s1 = inlined_call_operand.hbm [shape: bf16[16,128], index: 1, kind: input, shape index: {}]
  %s2 = inlined_call_operand.hbm [shape: f32[1,128], index: 2, kind: input, shape index: {}]
  %s3 = inlined_call_operand.hbm [shape: bf16[128,128], index: 3, kind: input, shape index: {}]
  %s4 = inlined_call_operand.hbm [shape: f32[1,128], index: 4, kind: input, shape index: {}]
  %s5 = inlined_call_operand.vmem [shape: bf16[8,128], index: 5, kind: input, shape index: {}]
  %s6 = inlined_call_operand.vmem [shape: f32[8,1], index: 6, kind: input, shape index: {}]
  %s7 = inlined_call_operand.vmem [shape: f32[8,8], index: 7, kind: output, shape index: {}]
  %s8 = sld [smem:[#allocation0]]
  $region54: #{discriminator_forward.1} parent=0
    _
  %s10 = ssub.s32 1, %s8
  %s11 = scalar_select 0, %s10, %s8
  $region1: #{discriminator_forward.1} parent=0
    #allocation2 [shape = 'u8[4096]{0}', space=vmem, size = 0x1000, scoped, tag = 'input window, operand 1, single buffered']
    #allocation3 [shape = 's32[1]{0}', space=sflag, size = 0x4, scoped, tag = 'scoped memory for discriminator_forward.1']
    #allocation4 [shape = 'u8[512]{0}', space=vmem, size = 0x400, scoped, tag = 'input window, operand 2, single buffered']
    #allocation5 [shape = 's32[1]{0}', space=sflag, size = 0x4, scoped, tag = 'scoped memory for discriminator_forward.1']
    #allocation6 [shape = 'u8[32768]{0}', space=vmem, size = 0x8000, scoped, tag = 'input window, operand 3, single buffered']
    #allocation7 [shape = 'u8[512]{0}', space=vmem, size = 0x400, scoped, tag = 'input window, operand 4, single buffered']
    #allocation8 [shape = 's32[1]{0}', space=sflag, size = 0x4, scoped, tag = 'scoped memory for discriminator_forward.1']
    %12 = vsyncpa [#allocation3], 0
    %13 = vsyncpa [#allocation5], 0
    %14 = vsyncpa [#allocation8], 0
    // Predicated region
    $region2: #{discriminator_forward.1} parent=1 // pred_check
      _
    $region3: #{discriminator_forward.1} parent=1 // pred_check_branch
      %16 = sbr.rel (0) target = $region5
    $region4: #{discriminator_forward.1} parent=1 // pred_region
      _
    $region5: #{discriminator_forward.1} parent=1 // pred_fallthru
      _
    // Predicated region
    $region6: #{discriminator_forward.1} parent=1 // pred_check
      _
    $region7: #{discriminator_forward.1} parent=1 // pred_check_branch
      %18 = sbr.rel (0) target = $region9
    $region8: #{discriminator_forward.1} parent=1 // pred_region
      %20 = vsyncadd [#allocation3], 0
      %s21 = sshll.u32 %s1, 4
      %s22 = int_to_ptr.hbm [resolvable:$true] %s21
      %s23 = sshll.u32 [#allocation2], 4
      %s24 = int_to_ptr.vmem [resolvable:$true] %s23
      %29 = dma.hbm_to_vmem [thread:$0]  %s22, 128, %s24, [#allocation3], 64, 64, 4
    $region9: #{discriminator_forward.1} parent=1 // pred_fallthru
      _
    // Predicated region
    $region10: #{discriminator_forward.1} parent=1 // pred_check
      _
    $region11: #{discriminator_forward.1} parent=1 // pred_check_branch
      %31 = sbr.rel (0) target = $region13
    $region12: #{discriminator_forward.1} parent=1 // pred_region
      %33 = vsyncadd [#allocation5], 0
      %s35 = sshll.u32 %s2, 4
      %s36 = int_to_ptr.hbm [resolvable:$true] %s35
      %s37 = sshll.u32 [#allocation4], 4
      %s38 = int_to_ptr.vmem [resolvable:$true] %s37
      %40 = dma.hbm_to_vmem [thread:$0]  %s36, 16, %s38, [#allocation5]
    $region13: #{discriminator_forward.1} parent=1 // pred_fallthru
      _
    // Predicated region
    $region14: #{discriminator_forward.1} parent=1 // pred_check
      _
    $region15: #{discriminator_forward.1} parent=1 // pred_check_branch
      %42 = sbr.rel (0) target = $region17
    $region16: #{discriminator_forward.1} parent=1 // pred_region
      %44 = vsyncadd [#allocation5], 0
      %s45 = sshll.u32 %s3, 4
      %s46 = int_to_ptr.hbm [resolvable:$true] %s45
      %s47 = sshll.u32 [#allocation6], 4
      %s48 = int_to_ptr.vmem [resolvable:$true] %s47
      %53 = dma.hbm_to_vmem [thread:$0]  %s46, 1024, %s48, [#allocation5], 64, 64, 4
    $region17: #{discriminator_forward.1} parent=1 // pred_fallthru
      _
    // Predicated region
    $region18: #{discriminator_forward.1} parent=1 // pred_check
      _
    $region19: #{discriminator_forward.1} parent=1 // pred_check_branch
      %55 = sbr.rel (0) target = $region21
    $region20: #{discriminator_forward.1} parent=1 // pred_region
      %57 = vsyncadd [#allocation8], 0
      %s59 = sshll.u32 %s4, 4
      %s60 = int_to_ptr.hbm [resolvable:$true] %s59
      %s61 = sshll.u32 [#allocation7], 4
      %s62 = int_to_ptr.vmem [resolvable:$true] %s61
      %64 = dma.hbm_to_vmem [thread:$0]  %s60, 16, %s62, [#allocation8]
    $region21: #{discriminator_forward.1} parent=1 // pred_fallthru
      _
    // Predicated region
    $region22: #{discriminator_forward.1} parent=1 // pred_check
      _
    $region23: #{discriminator_forward.1} parent=1 // pred_check_branch
      %66 = sbr.rel (0) target = $region25
    $region24: #{discriminator_forward.1} parent=1 // pred_region
      _
    $region25: #{discriminator_forward.1} parent=1 // pred_fallthru
      _
    // Predicated region
    $region26: #{discriminator_forward.1} parent=1 // pred_check
      _
    $region27: #{discriminator_forward.1} parent=1 // pred_check_branch
      %68 = sbr.rel (0) target = $region29
    $region28: #{discriminator_forward.1} parent=1 // pred_region
      _
    $region29: #{discriminator_forward.1} parent=1 // pred_fallthru
      _
    // Predicated region
    $region30: #{discriminator_forward.1} parent=1 // pred_check
      _
    $region31: #{discriminator_forward.1} parent=1 // pred_check_branch
      %70 = sbr.rel (0) target = $region33
    $region32: #{discriminator_forward.1} parent=1 // pred_region
      %72 = dma.done [#allocation3], 128
    $region33: #{discriminator_forward.1} parent=1 // pred_fallthru
      _
    // Predicated region
    $region34: #{discriminator_forward.1} parent=1 // pred_check
      _
    $region35: #{discriminator_forward.1} parent=1 // pred_check_branch
      %74 = sbr.rel (0) target = $region37
    $region36: #{discriminator_forward.1} parent=1 // pred_region
      %76 = dma.done [#allocation5], 16
    $region37: #{discriminator_forward.1} parent=1 // pred_fallthru
      _
    // Predicated region
    $region38: #{discriminator_forward.1} parent=1 // pred_check
      _
    $region39: #{discriminator_forward.1} parent=1 // pred_check_branch
      %78 = sbr.rel (0) target = $region41
    $region40: #{discriminator_forward.1} parent=1 // pred_region
      %80 = dma.done [#allocation5], 1024
    $region41: #{discriminator_forward.1} parent=1 // pred_fallthru
      _
    // Predicated region
    $region42: #{discriminator_forward.1} parent=1 // pred_check
      _
    $region43: #{discriminator_forward.1} parent=1 // pred_check_branch
      %82 = sbr.rel (0) target = $region45
    $region44: #{discriminator_forward.1} parent=1 // pred_region
      %84 = dma.done [#allocation8], 16
    $region45: #{discriminator_forward.1} parent=1 // pred_fallthru
      _
    %v86 = vld [vmem:[%s0] sm:$0xff]
    %v87 = vpack.c.bf16 %v86, %v86
    %v88 = vld [vmem:[#allocation2] sm:$0xf]
    %v89 = vld [vmem:[#allocation2 + $0x4] sm:$0xf]
    %v90 = vld [vmem:[#allocation4] sm:$0x1]
    %v92 = vperm.slane %v90, 0
    %v96 = vunpack.c.l.b16 %v88
    %v97 = vunpack.c.l.b16 %v89
    %v98 = vpack.c.b16 %v97, %v96
    %vm100 = vcmask 130048
    %v102 = vsel %vm100, %v87, 0
    %104 = vmatpush.bf16.msra.mxu0 0
    %105 = vmatpush.bf16.msra.mxu0 0
    %106 = vmatpush.bf16.msra.mxu0 0
    %107 = vmatpush.bf16.msra.mxu0 0
    %108 = vmatpush.bf16.msra.mxu0 0
    %109 = vmatpush.bf16.msra.mxu0 0
    %110 = vmatpush.bf16.msra.mxu0 0
    %111 = vmatpush.bf16.msra.mxu0 %v98
    %112 = vmatmul.bf16.gmra.mxu0 %v102
    %v113 = vpop.f32.mrf.mxu0
    %v114 = vadd.f32 %v92, %v113
    %v115 = vpop.f32.mrf.mxu0
    %116 = vdwg.mxu0
    %v117 = vmax.f32 %v114, 0.0
    %v118 = vpack.c.bf16 %v117, %v117
    %v119 = vld [vmem:[#allocation6] sm:$0xf]
    %v120 = vld [vmem:[#allocation6 + $0x4] sm:$0xf]
    %v121 = vld [vmem:[#allocation6 + $0x8] sm:$0xf]
    %v122 = vld [vmem:[#allocation6 + $0xc] sm:$0xf]
    %v123 = vld [vmem:[#allocation6 + $0x10] sm:$0xf]
    %v124 = vld [vmem:[#allocation6 + $0x14] sm:$0xf]
    %v125 = vld [vmem:[#allocation6 + $0x18] sm:$0xf]
    %v126 = vld [vmem:[#allocation6 + $0x1c] sm:$0xf]
    %v127 = vld [vmem:[#allocation6 + $0x20] sm:$0xf]
    %v128 = vld [vmem:[#allocation6 + $0x24] sm:$0xf]
    %v129 = vld [vmem:[#allocation6 + $0x28] sm:$0xf]
    %v130 = vld [vmem:[#allocation6 + $0x2c] sm:$0xf]
    %v131 = vld [vmem:[#allocation6 + $0x30] sm:$0xf]
    %v132 = vld [vmem:[#allocation6 + $0x34] sm:$0xf]
    %v133 = vld [vmem:[#allocation6 + $0x38] sm:$0xf]
    %v134 = vld [vmem:[#allocation6 + $0x3c] sm:$0xf]
    %v135 = vld [vmem:[#allocation7] sm:$0x1]
    %v137 = vperm.slane %v135, 0
    %v155 = vunpack.c.l.b16 %v119
    %v156 = vunpack.c.l.b16 %v120
    %v157 = vunpack.c.l.b16 %v121
    %v158 = vunpack.c.l.b16 %v122
    %v159 = vunpack.c.l.b16 %v123
    %v160 = vunpack.c.l.b16 %v124
    %v161 = vunpack.c.l.b16 %v125
    %v162 = vunpack.c.l.b16 %v126
    %v163 = vunpack.c.l.b16 %v127
    %v164 = vunpack.c.l.b16 %v128
    %v165 = vunpack.c.l.b16 %v129
    %v166 = vunpack.c.l.b16 %v130
    %v167 = vunpack.c.l.b16 %v131
    %v168 = vunpack.c.l.b16 %v132
    %v169 = vunpack.c.l.b16 %v133
    %v170 = vunpack.c.l.b16 %v134
    %v171 = vpack.c.b16 %v156, %v155
    %v172 = vpack.c.b16 %v158, %v157
    %v173 = vpack.c.b16 %v160, %v159
    %v174 = vpack.c.b16 %v162, %v161
    %v175 = vpack.c.b16 %v164, %v163
    %v176 = vpack.c.b16 %v166, %v165
    %v177 = vpack.c.b16 %v168, %v167
    %v178 = vpack.c.b16 %v170, %v169
    %187 = vmatpush.bf16.msra.mxu0 %v178
    %188 = vmatpush.bf16.msra.mxu0 %v177
    %189 = vmatpush.bf16.msra.mxu0 %v176
    %190 = vmatpush.bf16.msra.mxu0 %v175
    %191 = vmatpush.bf16.msra.mxu0 %v174
    %192 = vmatpush.bf16.msra.mxu0 %v173
    %193 = vmatpush.bf16.msra.mxu0 %v172
    %194 = vmatpush.bf16.msra.mxu0 %v171
    %195 = vmatmul.bf16.gmra.mxu0 %v118
    %v196 = vpop.f32.mrf.mxu0
    %v197 = vadd.f32 %v137, %v196
    %v198 = vpop.f32.mrf.mxu0
    %199 = vdwg.mxu0
    %v200 = vmax.f32 %v197, 0.0
    %v201 = vld [vmem:[%s5] sm:$0xf]
    %v202 = vpack.c.bf16 %v200, %v200
    %v203 = vld [vmem:[%s6] sm:$0xff]
    %205 = vset.pattern.permute.xlu0 0
    %206 = vperm.xlu0 %205, %v203
    %v207 = vpop.permute.xlu0 %206
    %209 = vmatpush.bf16.xpose.msra.mxu0 0
    %210 = vmatpush.bf16.xpose.msra.mxu0 0
    %211 = vmatpush.bf16.xpose.msra.mxu0 0
    %212 = vmatpush.bf16.xpose.msra.mxu0 0
    %213 = vmatpush.bf16.xpose.msra.mxu0 0
    %214 = vmatpush.bf16.xpose.msra.mxu0 0
    %215 = vmatpush.bf16.xpose.msra.mxu0 0
    %216 = vmatpush.bf16.xpose.msra.mxu0 %v202
    %217 = vmatmul.bf16.gmra.mxu0 %v201
    %v218 = vpop.f32.mrf.mxu0
    %v219 = vadd.f32 %v207, %v218
    %v220 = vpop.f32.mrf.mxu0
    %221 = vdwg.mxu0
    %v222 = vxor.u32 %v219, 2147483648
    %v223 = vmul.f32 %v222, 1.442695
    %v224 = vpow.pop %v223
    %v225 = vadd.f32 %v224, 1.0
    %v226 = vrcp.pop %v225
    %v227 = vmul.f32 %v225, %v226
    %v228 = vsub.f32 1.0, %v227
    %v229 = vmul.f32 %v226, %v228
    %v230 = vadd.f32 %v226, %v229
    %vm231 = vweird.f32 %v225
    %vm232 = vweird.f32 %v226
    %vm233 = vmor %vm231, %vm232
    %v234 = vsel %vm233, %v226, %v230
    %v235 = vand.u32 2147483647, %v225
    %vm236 = vcmp.eq.f32.partialorder %v235, 8.507059e+37
    %v237 = vand.u32 %v225, 2147483648
    %v238 = vor.u32 1.1754944e-38, %v237
    %v239 = vsel %vm236, %v238, %v234
    %v240 = vmul.f32 1.0, %v239
    %vm241 = vcmask 64512
    %242 = vst.msk [vmem:[%s7] sm:$0xff] %vm241, %v240
    // Predicated region
    $region46: #{discriminator_forward.1} parent=1 // pred_check
      _
    $region47: #{discriminator_forward.1} parent=1 // pred_check_branch
      %244 = sbr.rel (0) target = $region49
    $region48: #{discriminator_forward.1} parent=1 // pred_region
      _
    $region49: #{discriminator_forward.1} parent=1 // pred_fallthru
      _
    // Predicated region
    $region50: #{discriminator_forward.1} parent=1 // pred_check
      _
    $region51: #{discriminator_forward.1} parent=1 // pred_check_branch
      %246 = sbr.rel (0) target = $region53
    $region52: #{discriminator_forward.1} parent=1 // pred_region
      _
    $region53: #{discriminator_forward.1} parent=1 // pred_fallthru
      _
    %247 = vsyncpa [#allocation3], 1
    %248 = vsyncpa [#allocation5], 1
    %249 = vsyncpa [#allocation8], 1

</llo_original>
